<compile_context>
chip_gen: v6e
topology: v6e:2x2x1
jax: 0.10.0
libtpu: 0.0.40
codegen_flags: <defaults>
</compile_context>

<pallas_src>
import functools

import numpy as np

import jax
import jax.numpy as jnp
from jax.experimental import pallas as pl
from jax.experimental.pallas import tpu as pltpu

LANE = 128            # pad output channels (N) to this
SUB = 16              # sublane rounding (bf16-safe)
TK = 512              # K tile when splitting is required
K_SPLIT_BYTES = 12 * 2**20   # split K only above this per-step footprint


def _round_up(v, m):
    return (v + m - 1) // m * m


# ----------------------------------------------------------------------------
# Fused matmul + affine + activation Pallas kernels
# ----------------------------------------------------------------------------
def _epilogue(act, y, s, b):
    y = y * s + b
    if act == "relu":
        y = jnp.maximum(y, 0.0)
    elif act == "sigmoid":
        y = jax.nn.sigmoid(y)
    elif act == "tanh":
        y = jnp.tanh(y)
    return y


def _mm_kernel_single(act, x_ref, w_ref, s_ref, b_ref, o_ref):
    # Single-K fast path: no accumulator scratch, no init/finalize.
    y = jnp.dot(x_ref[...], w_ref[...], preferred_element_type=jnp.float32)
    o_ref[...] = _epilogue(act, y, s_ref[...], b_ref[...]).astype(o_ref.dtype)


def _mm_kernel_acc(act, x_ref, w_ref, s_ref, b_ref, o_ref, acc_ref):
    # K-tiled path with a f32 VMEM accumulator (only used for very large K).
    k = pl.program_id(2)

    @pl.when(k == 0)
    def _():
        acc_ref[...] = jnp.zeros_like(acc_ref)

    acc_ref[...] += jnp.dot(x_ref[...], w_ref[...],
                            preferred_element_type=jnp.float32)

    @pl.when(k == pl.num_programs(2) - 1)
    def _():
        o_ref[...] = _epilogue(act, acc_ref[...], s_ref[...],
                               b_ref[...]).astype(o_ref.dtype)


def _matmul_packed(x, blk, act="none", out_dtype=jnp.float32):
    """y = act((x @ W) * scale + shift) with pre-packed, lane-dense weights.

    x: (M, K) any float dtype.  blk["w"]: (K, Np) bf16, Np % 128 == 0;
    blk["scale"]/["shift"]: (1, Np) f32; blk["n"]: real N.  Returns (M, n).
    """
    w, sc, sh, n = blk["w"], blk["scale"], blk["shift"], blk["n"]
    M, K = x.shape
    Kw, Np = w.shape
    assert Kw == K, (Kw, K)

    # N tile: largest of (512, 256, 128) dividing Np -> bounds per-step weight
    # tile and provides a parallel axis (v7x dual TensorCores).
    tn = next(c for c in (512, 256, 128) if Np % c == 0)

    # Adaptive M tile: big tiles for small-K / narrow-N (mem-bound) matmuls.
    tm_cap = 1024 if (K <= 256 and Np <= 256) else 512
    if M <= tm_cap:
        steps_m = 1
        tm = _round_up(max(M, 8), SUB)
    else:
        steps_m = -(-M // tm_cap)
        tm = _round_up(-(-M // steps_m), SUB)
    Mp = tm * steps_m
    if Mp != M:
        x = jnp.pad(x, ((0, Mp - M), (0, 0)))
    xb = x.astype(jnp.bfloat16)

    out_bytes = jnp.dtype(out_dtype).itemsize

    def footprint(tk, acc):
        # double-buffered bf16 inputs + double-buffered output + f32 dot temp
        return (2 * (tm * tk + tk * tn) * 2 + 2 * tm * tn * out_bytes
                + tm * tn * 4 + (tm * tn * 4 if acc else 0))

    if footprint(K, False) <= K_SPLIT_BYTES:
        # ------------------------------ single-K fast path ------------------
        vlim = int(max(16 * 2**20, min(48 * 2**20, 4 * footprint(K, False))))
        out = pl.pallas_call(
            functools.partial(_mm_kernel_single, act),
            out_shape=jax.ShapeDtypeStruct((Mp, Np), out_dtype),
            grid=(steps_m, Np // tn),
            in_specs=[
                pl.BlockSpec((tm, K), lambda i, j: (i, 0)),
                pl.BlockSpec((K, tn), lambda i, j: (0, j)),
                pl.BlockSpec((1, tn), lambda i, j: (0, j)),
                pl.BlockSpec((1, tn), lambda i, j: (0, j)),
            ],
            out_specs=pl.BlockSpec((tm, tn), lambda i, j: (i, j)),
            compiler_params=pltpu.CompilerParams(
                dimension_semantics=("parallel", "parallel"),
                vmem_limit_bytes=vlim),
        )(xb, w, sc, sh)
    else:
        # ------------------------------ K-tiled accumulator path ------------
        tk = TK
        Kp = _round_up(K, tk)
        if Kp != K:
            xb = jnp.pad(xb, ((0, 0), (0, Kp - K)))
            w = jnp.pad(w, ((0, Kp - K), (0, 0)))
        vlim = int(max(16 * 2**20, min(48 * 2**20, 4 * footprint(tk, True))))
        out = pl.pallas_call(
            functools.partial(_mm_kernel_acc, act),
            out_shape=jax.ShapeDtypeStruct((Mp, Np), out_dtype),
            grid=(steps_m, Np // tn, Kp // tk),
            in_specs=[
                pl.BlockSpec((tm, tk), lambda i, j, k: (i, k)),
                pl.BlockSpec((tk, tn), lambda i, j, k: (k, j)),
                pl.BlockSpec((1, tn), lambda i, j, k: (0, j)),
                pl.BlockSpec((1, tn), lambda i, j, k: (0, j)),
            ],
            out_specs=pl.BlockSpec((tm, tn), lambda i, j, k: (i, j)),
            scratch_shapes=[pltpu.VMEM((tm, tn), jnp.float32)],
            compiler_params=pltpu.CompilerParams(
                dimension_semantics=("parallel", "parallel", "arbitrary"),
                vmem_limit_bytes=vlim),
        )(xb, w, sc, sh)
    return out[:M, :n]


# ----------------------------------------------------------------------------
# Weight packing (done ONCE at init, never inside the jitted forward)
# ----------------------------------------------------------------------------
def _pack_mm(wmat, scale, shift):
    """Pad N to a lane multiple of 128, cast weight to bf16, scale/shift f32."""
    K, N = wmat.shape
    Np = _round_up(N, LANE)
    w = jnp.pad(wmat, ((0, 0), (0, Np - N))).astype(jnp.bfloat16)
    sc = jnp.pad(scale, (0, Np - N)).reshape(1, Np).astype(jnp.float32)
    sh = jnp.pad(shift, (0, Np - N)).reshape(1, Np).astype(jnp.float32)
    return {"w": w, "scale": sc, "shift": sh, "n": N}


def _convT_subpixel_wc(w):
    """ConvTranspose2d(4,2,1) weights (Cin,Cout,4,4) -> wc[dy,dx,ci,ry,rx,co]:
    each output phase (ry,rx) is a stride-1 2x2 conv over a shared 3x3 window
    of the 1-padded low-res input (oy = 2*iy - 1 + ky)."""
    cin, cout = w.shape[0], w.shape[1]
    wc = jnp.zeros((3, 3, cin, 2, 2, cout), jnp.float32)
    for ry in range(2):
        for rx in range(2):
            for dy2 in range(2):
                for dx2 in range(2):
                    dy, dx = ry + dy2, rx + dx2
                    ky, kx = 3 - ry - 2 * dy2, 3 - rx - 2 * dx2
                    wc = wc.at[dy, dx, :, ry, rx, :].set(w[:, :, ky, kx])
    return wc


def _choose_p(w_in, cout):
    """Horizontal phase-packing factor: largest p dividing the input width
    with p*4*Cout <= 128 lanes."""
    for cand in (8, 4, 2, 1):
        if w_in % cand == 0 and cand * 4 * cout <= LANE:
            return cand
    return 1


def _make_convT_block(w, bias, gamma, beta, mean, var, w_in):
    """Pack ConvTranspose2d(4,2,1)+BN into one lane-dense matmul block with a
    horizontal packing factor p.  K order = (dy, dxw, ci) over a 3x(p+2)
    window; N order = (j, ry, rx, co)."""
    cin, cout = w.shape[0], w.shape[1]
    scale = gamma / jnp.sqrt(var + 1e-5)          # BN (eval) folded with bias
    shift = beta + scale * (bias - mean)
    p = _choose_p(w_in, cout)

    wc = _convT_subpixel_wc(w)                    # (3,3,Cin,2,2,Cout)
    wide = jnp.zeros((3, p + 2, cin, p, 2, 2, cout), jnp.float32)
    for j in range(p):
        wide = wide.at[:, j:j + 3, :, j].set(wc)
    wmat = wide.reshape(3 * (p + 2) * cin, p * 4 * cout)

    blk = _pack_mm(wmat, jnp.tile(scale, p * 4), jnp.tile(shift, p * 4))
    blk["p"] = p
    blk["cout"] = cout
    return blk


def _init_conv_bn(key, cin, cout, k):
    """Synthetic Conv2d(k,s=2,p=1)+BN block, BN folded in eval mode, packed."""
    kw_, kb, kg, kbe, km, kv = jax.random.split(key, 6)
    fan_in = cin * k * k
    w = jax.random.normal(kw_, (cout, cin, k, k), jnp.float32) / jnp.sqrt(float(fan_in))
    b = 0.01 * jax.random.normal(kb, (cout,), jnp.float32)
    gamma = 1.0 + 0.1 * jax.random.normal(kg, (cout,), jnp.float32)
    beta = 0.01 * jax.random.normal(kbe, (cout,), jnp.float32)
    mean = 0.01 * jax.random.normal(km, (cout,), jnp.float32)
    var = 1.0 + 0.1 * jnp.abs(jax.random.normal(kv, (cout,), jnp.float32))
    scale = gamma / jnp.sqrt(var + 1e-5)
    shift = beta + scale * (b - mean)
    wmat = w.transpose(2, 3, 1, 0).reshape(k * k * cin, cout)   # (ky,kx,ci)->co
    blk = _pack_mm(wmat, scale, shift)
    blk["k"] = k
    return blk


def _init_convT_bn(key, cin, cout, w_in):
    kw_, kb, kg, kbe, km, kv = jax.random.split(key, 6)
    w = jax.random.normal(kw_, (cin, cout, 4, 4), jnp.float32) / jnp.sqrt(float(cin * 16))
    b = 0.01 * jax.random.normal(kb, (cout,), jnp.float32)
    gamma = 1.0 + 0.1 * jax.random.normal(kg, (cout,), jnp.float32)
    beta = 0.01 * jax.random.normal(kbe, (cout,), jnp.float32)
    mean = 0.01 * jax.random.normal(km, (cout,), jnp.float32)
    var = 1.0 + 0.1 * jnp.abs(jax.random.normal(kv, (cout,), jnp.float32))
    return _make_convT_block(w, b, gamma, beta, mean, var, w_in)


def init_params(key, n_class):
    keys = iter(jax.random.split(key, 32))
    p = {}

    # Synthetic stand-in for the external ResNet backbone (flatten -> 2048).
    # TODO(synk): pretrained torchvision ResNet-50 weights/blocks are not loaded.
    chans = [3, 32, 64, 128, 2048]
    p["backbone"] = [_init_conv_bn(next(keys), chans[i], chans[i + 1], 3)
                     for i in range(len(chans) - 1)]

    # projection: nn.Linear(2048, 512)
    kw_, kb = jax.random.split(next(keys))
    w = jax.random.normal(kw_, (2048, 512), jnp.float32) / jnp.sqrt(2048.0)
    b = 0.01 * jax.random.normal(kb, (512,), jnp.float32)
    p["proj"] = _pack_mm(w, jnp.ones((512,), jnp.float32), b)

    # OutputLayer: Linear(512, n_class) with normal_(0, 0.1) weights, zero bias.
    w = 0.1 * jax.random.normal(next(keys), (512, n_class), jnp.float32)
    p["out"] = _pack_mm(w, jnp.ones((n_class,), jnp.float32),
                        jnp.zeros((n_class,), jnp.float32))

    # decoder: Linear(512, 3*8*7*7) + 5x ConvTranspose2d(4,2,1)+BN blocks.
    kw_, kb = jax.random.split(next(keys))
    w = jax.random.normal(kw_, (512, 1176), jnp.float32) / jnp.sqrt(512.0)
    b = 0.01 * jax.random.normal(kb, (1176,), jnp.float32)
    p["dec_proj"] = _pack_mm(w, jnp.ones((1176,), jnp.float32), b)

    up_ch = [24, 24, 12, 6, 6, 3]
    widths = [7, 14, 28, 56, 112]
    p["dec_cnn"] = [_init_convT_bn(next(keys), up_ch[i], up_ch[i + 1], widths[i])
                    for i in range(5)]
    return p


# ----------------------------------------------------------------------------
# Layer wrappers (im2col glue is fused by XLA with the adjacent reshapes)
# ----------------------------------------------------------------------------
def conv2d_block(h, blk, stride, pad, act):
    """h: (B,H,W,Cin) NHWC bf16; packed blk from _init_conv_bn."""
    B, H, W, cin = h.shape
    k = blk["k"]
    xp = jnp.pad(h, ((0, 0), (pad, pad), (pad, pad), (0, 0)))
    Ho = (H + 2 * pad - k) // stride + 1
    Wo = (W + 2 * pad - k) // stride + 1
    cols = [xp[:, dy:dy + stride * (Ho - 1) + 1:stride,
               dx:dx + stride * (Wo - 1) + 1:stride, :]
            for dy in range(k) for dx in range(k)]
    cols = jnp.stack(cols, axis=3).reshape(B * Ho * Wo, k * k * cin)
    y = _matmul_packed(cols, blk, act, out_dtype=jnp.bfloat16)
    return y.reshape(B, Ho, Wo, blk["n"])


def conv_transpose_block(h, blk, act):
    """PyTorch ConvTranspose2d(Cin,Cout,4,2,1)+BN+act on NHWC input, lowered to
    horizontally-packed sub-pixel convolution (one lane-dense matmul)."""
    B, H, W, cin = h.shape
    p, cout = blk["p"], blk["cout"]
    wb = W // p
    xp = jnp.pad(h, ((0, 0), (1, 1), (1, 1), (0, 0)))
    pieces = [xp[:, dy:dy + H, dxw:dxw + p * (wb - 1) + 1:p, :]
              for dy in range(3) for dxw in range(p + 2)]
    cols = jnp.stack(pieces, axis=3).reshape(B * H * wb, 3 * (p + 2) * cin)
    y = _matmul_packed(cols, blk, act, out_dtype=jnp.bfloat16)
    y = y.reshape(B, H, wb, p, 2, 2, cout)                  # (b,y,xblk,j,ry,rx,c)
    y = y.transpose(0, 1, 4, 2, 3, 5, 6).reshape(B, 2 * H, 2 * W, cout)
    return y


# ----------------------------------------------------------------------------
# Module forwards
# ----------------------------------------------------------------------------
def backbone_forward(x_nchw, params):
    """Synthetic ResNet stand-in: stride-2 Conv+BN+ReLU stages, global avgpool,
    flatten -> (B, 2048).  Activations kept NHWC bf16 between layers."""
    h = x_nchw.transpose(0, 2, 3, 1).astype(jnp.bfloat16)    # NCHW -> NHWC once
    for blk in params["backbone"]:
        h = conv2d_block(h, blk, stride=2, pad=1, act="relu")
    return jnp.mean(h.astype(jnp.float32), axis=(1, 2))      # (B, 2048)


def decoder_forward(feat, params):
    B = feat.shape[0]
    h = _matmul_packed(feat, params["dec_proj"], "none",
                       out_dtype=jnp.bfloat16)               # (B, 1176)
    # PyTorch view(B, 24, 7, 7) is channel-major -> convert to NHWC once.
    h = h.reshape(B, 24, 7, 7).transpose(0, 2, 3, 1)
    for blk in params["dec_cnn"][:-1]:                       # ConvT+BN+ReLU x4
        h = conv_transpose_block(h, blk, "relu")
    h = conv_transpose_block(h, params["dec_cnn"][-1], "tanh")  # ConvT+BN+Tanh
    return h.transpose(0, 3, 1, 2).astype(jnp.float32)       # NHWC -> NCHW, f32


def extractor_512_forward(x, params):
    dense = backbone_forward(x, params)                      # flatten(ResNet(x),1)
    dense = _matmul_packed(dense, params["proj"], "none",
                           out_dtype=jnp.float32)            # projection (B,512)
    logits = _matmul_packed(dense, params["out"], "sigmoid",
                            out_dtype=jnp.float32)           # OutputLayer
    recon = decoder_forward(dense, params)                   # decoder
    return logits, recon


# ----------------------------------------------------------------------------
# Self-check of the sub-pixel ConvTranspose packing against a naive reference
# ----------------------------------------------------------------------------
def _reference_conv_transpose(x_nhwc, w, bias):
    """Direct PyTorch ConvTranspose2d(4,2,1) semantics: oy = 2*iy - 1 + ky."""
    x = np.asarray(x_nhwc, np.float32)
    w = np.asarray(w, np.float32)
    b = np.asarray(bias, np.float32)
    B, H, W, cin = x.shape
    cout = w.shape[1]
    out = np.zeros((B, 2 * H, 2 * W, cout), np.float32)
    for iy in range(H):
        for ix in range(W):
            for ky in range(4):
                for kx in range(4):
                    oy, ox = 2 * iy - 1 + ky, 2 * ix - 1 + kx
                    if 0 <= oy < 2 * H and 0 <= ox < 2 * W:
                        out[:, oy, ox, :] += x[:, iy, ix, :] @ w[:, :, ky, kx]
    return out + b


def _selfcheck_convT(key):
    # Covers both a horizontally-packed case (p=4) and the p=1 case.
    for cin, cout, hw in ((4, 2, 4), (8, 24, 2)):
        k1, k2, k3, key = jax.random.split(key, 4)
        w = jax.random.normal(k1, (cin, cout, 4, 4), jnp.float32)
        b = 0.1 * jax.random.normal(k2, (cout,), jnp.float32)
        x = jax.random.normal(k3, (2, hw, hw, cin), jnp.float32)
        x_bf = x.astype(jnp.bfloat16)
        blk = _make_convT_block(
            w, b,
            jnp.ones((cout,), jnp.float32), jnp.zeros((cout,), jnp.float32),
            jnp.zeros((cout,), jnp.float32),
            jnp.ones((cout,), jnp.float32) - 1e-5,            # scale == 1 exactly
            hw)
        got = np.asarray(conv_transpose_block(x_bf, blk, "none")
                         .astype(jnp.float32))
        w_r = np.asarray(jnp.asarray(w).astype(jnp.bfloat16).astype(jnp.float32))
        x_r = np.asarray(x_bf.astype(jnp.float32))
        ref = _reference_conv_transpose(x_r, w_r, np.asarray(b))
        np.testing.assert_allclose(got, ref, atol=1e-1, rtol=5e-2)


# ----------------------------------------------------------------------------
if __name__ == "__main__":
    key = jax.random.PRNGKey(0)
    ckey, pkey, xkey = jax.random.split(key, 3)

    # Numerical validation of the ConvTranspose2d(4,2,1) sub-pixel packing.
    _selfcheck_convT(ckey)

    B, C, H, W = 2, 3, 64, 64
    n_class = 5

    params = init_params(pkey, n_class)
    x = jax.random.normal(xkey, (B, C, H, W), jnp.float32)

    # Close over params so the pre-packed static metadata (n, p, cout) stays
    # static under jit.
    fwd = jax.jit(lambda inp: extractor_512_forward(inp, params))
    logits, recon = fwd(x)
    jax.block_until_ready((logits, recon))

    assert logits.shape == (B, n_class)
    assert recon.shape == (B, 3, 224, 224)
    assert bool(jnp.all(jnp.isfinite(logits))) and bool(jnp.all(jnp.isfinite(recon)))
    print("KERNEL_OK")
</pallas_src>

<mosaic_0001>
module attributes {stable_mosaic.version = 11 : i64} {
  func.func @_mm_kernel_single(%arg0: i32, %arg1: i32, %arg2: memref<16x72xbf16, #tpu.memory_space<vmem>>, %arg3: memref<72x128xbf16, #tpu.memory_space<vmem>>, %arg4: memref<1x128xf32, #tpu.memory_space<vmem>>, %arg5: memref<1x128xf32, #tpu.memory_space<vmem>>, %arg6: memref<16x128xbf16, #tpu.memory_space<vmem>>) attributes {dimension_semantics = [#tpu.dimension_semantics<parallel>, #tpu.dimension_semantics<parallel>], iteration_bounds = array<i64: 1, 1>, scalar_prefetch = 0 : i64, scratch_operands = 0 : i64, tpu.core_type = #tpu.core_type<tc>, window_params = [{transform_indices = @transform_0, window_bounds = array<i64: 16, 72>}, {transform_indices = @transform_1, window_bounds = array<i64: 72, 128>}, {transform_indices = @transform_2, window_bounds = array<i64: 1, 128>}, {transform_indices = @transform_3, window_bounds = array<i64: 1, 128>}, {transform_indices = @transform_4, window_bounds = array<i64: 16, 128>}]} {
    %c0 = arith.constant 0 : index
    %c0_0 = arith.constant 0 : index
    %0 = vector.load %arg2[%c0, %c0_0] : memref<16x72xbf16, #tpu.memory_space<vmem>>, vector<16x72xbf16>
    %c0_1 = arith.constant 0 : index
    %c0_2 = arith.constant 0 : index
    %1 = vector.load %arg3[%c0_1, %c0_2] : memref<72x128xbf16, #tpu.memory_space<vmem>>, vector<72x128xbf16>
    %cst = arith.constant dense<0.000000e+00> : vector<16x128xf32>
    %2 = tpu.matmul %0, %1, %cst {dimension_numbers = #tpu.dot_dimension_numbers<[1], [0], [0], [1], [0, 0, 1, 1], [], []>} : vector<16x72xbf16>, vector<72x128xbf16>, vector<16x128xf32> -> vector<16x128xf32>
    %c0_3 = arith.constant 0 : index
    %c0_4 = arith.constant 0 : index
    %3 = vector.load %arg4[%c0_3, %c0_4] : memref<1x128xf32, #tpu.memory_space<vmem>>, vector<1x128xf32>
    %c0_5 = arith.constant 0 : index
    %c0_6 = arith.constant 0 : index
    %4 = vector.load %arg5[%c0_5, %c0_6] : memref<1x128xf32, #tpu.memory_space<vmem>>, vector<1x128xf32>
    %5 = vector.broadcast %3 : vector<1x128xf32> to vector<16x128xf32>
    %6 = arith.mulf %2, %5 : vector<16x128xf32>
    %7 = vector.broadcast %4 : vector<1x128xf32> to vector<16x128xf32>
    %8 = arith.addf %6, %7 : vector<16x128xf32>
    %9 = arith.truncf %8 : vector<16x128xf32> to vector<16x128xbf16>
    %c0_7 = arith.constant 0 : index
    %c0_8 = arith.constant 0 : index
    %10 = vector.load %arg6[%c0_7, %c0_8] : memref<16x128xbf16, #tpu.memory_space<vmem>>, vector<16x128xbf16>
    tpu.vector_store %arg6[%c0_7, %c0_8], %9 {strides = array<i32>} : memref<16x128xbf16, #tpu.memory_space<vmem>>, vector<16x128xbf16>,
    return
  }
  func.func @transform_0(%arg0: i32, %arg1: i32) -> (i32, i32) {
    %c0_i32 = arith.constant 0 : i32
    %c0_i32_0 = arith.constant 0 : i32
    return %arg0, %c0_i32 : i32, i32
  }
  func.func @transform_1(%arg0: i32, %arg1: i32) -> (i32, i32) {
    %c0_i32 = arith.constant 0 : i32
    %c0_i32_0 = arith.constant 0 : i32
    return %c0_i32, %arg1 : i32, i32
  }
  func.func @transform_2(%arg0: i32, %arg1: i32) -> (i32, i32) {
    %c0_i32 = arith.constant 0 : i32
    %c0_i32_0 = arith.constant 0 : i32
    return %c0_i32, %arg1 : i32, i32
  }
  func.func @transform_3(%arg0: i32, %arg1: i32) -> (i32, i32) {
    %c0_i32 = arith.constant 0 : i32
    %c0_i32_0 = arith.constant 0 : i32
    return %c0_i32, %arg1 : i32, i32
  }
  func.func @transform_4(%arg0: i32, %arg1: i32) -> (i32, i32) {
    %c0_i32 = arith.constant 0 : i32
    return %arg0, %arg1 : i32, i32
  }
}

</mosaic_0001>

<llo_original>
// kernel: tpu_custom_call.1
$region0: #{tpu_custom_call.1}
  #allocation0 [shape = 'u32[]', space=smem, size = 0x4, offset = 0x4, fixed_abs, tag = 'smem constant byte address 0x4 - core index']
  #allocation1 [shape = 'u32[144,128]{1,0:T(1,128)}', space=vmem, size = 0x12000, scoped, tag = 'internal scratch']
  %s0 = inlined_call_operand.hbm [shape: bf16[16,72], index: 0, kind: input, shape index: {}]
  %s1 = inlined_call_operand.hbm [shape: bf16[72,128], index: 1, kind: input, shape index: {}]
  %s2 = inlined_call_operand.vmem [shape: f32[1,128], index: 2, kind: input, shape index: {}]
  %s3 = inlined_call_operand.vmem [shape: f32[1,128], index: 3, kind: input, shape index: {}]
  %s4 = inlined_call_operand.hbm [shape: bf16[16,128], index: 4, kind: output, shape index: {}]
  %s5 = sld [smem:[#allocation0]]
  $region34: #{tpu_custom_call.1} parent=0
    _
  %s7 = ssub.s32 1, %s5
  %s8 = scalar_select 0, %s7, %s5
  $region1: #{tpu_custom_call.1} parent=0
    #allocation2 [shape = 'u8[4096]{0}', space=vmem, size = 0x1000, scoped, tag = 'input window, operand 0, single buffered']
    #allocation3 [shape = 's32[1]{0}', space=sflag, size = 0x4, scoped, tag = 'scoped memory for tpu_custom_call.1']
    #allocation4 [shape = 's32[1]{0}', space=sflag, size = 0x4, scoped, tag = 'scoped memory for tpu_custom_call.1']
    #allocation5 [shape = 'u8[18432]{0}', space=vmem, size = 0x4800, scoped, tag = 'input window, operand 1, single buffered']
    #allocation6 [shape = 's32[1]{0}', space=sflag, size = 0x4, scoped, tag = 'scoped memory for tpu_custom_call.1']
    #allocation7 [shape = 'u8[4096]{0}', space=vmem, size = 0x1000, scoped, tag = 'output window, operand 0, single buffered']
    %9 = vsyncpa [#allocation3], 0
    %10 = vsyncpa [#allocation6], 0
    %11 = vsyncpa [#allocation4], 0
    // Predicated region
    $region2: #{tpu_custom_call.1} parent=1 // pred_check
      _
    $region3: #{tpu_custom_call.1} parent=1 // pred_check_branch
      %13 = sbr.rel (0) target = $region5
    $region4: #{tpu_custom_call.1} parent=1 // pred_region
      %s15 = ssub.s32 128, 128
      %16 = vsyncadd [#allocation3], %s15
      %s17 = sshll.u32 [#allocation2], 4
      %s18 = int_to_ptr.vmem [resolvable:$true] %s17
      %23 = dma.hbm_to_vmem [thread:$0]  %s0, 128, %s18, [#allocation3], 64, 64, 4
    $region5: #{tpu_custom_call.1} parent=1 // pred_fallthru
      _
    // Predicated region
    $region6: #{tpu_custom_call.1} parent=1 // pred_check
      _
    $region7: #{tpu_custom_call.1} parent=1 // pred_check_branch
      %25 = sbr.rel (0) target = $region9
    $region8: #{tpu_custom_call.1} parent=1 // pred_region
      %s27 = ssub.s32 576, 576
      %28 = vsyncadd [#allocation6], %s27
      %s29 = sshll.u32 [#allocation5], 4
      %s30 = int_to_ptr.vmem [resolvable:$true] %s29
      %35 = dma.hbm_to_vmem [thread:$0]  %s1, 576, %s30, [#allocation6], 64, 64, 4
    $region9: #{tpu_custom_call.1} parent=1 // pred_fallthru
      _
    // Predicated region
    $region10: #{tpu_custom_call.1} parent=1 // pred_check
      _
    $region11: #{tpu_custom_call.1} parent=1 // pred_check_branch
      %37 = sbr.rel (0) target = $region13
    $region12: #{tpu_custom_call.1} parent=1 // pred_region
      _
    $region13: #{tpu_custom_call.1} parent=1 // pred_fallthru
      _
    // Predicated region
    $region14: #{tpu_custom_call.1} parent=1 // pred_check
      _
    $region15: #{tpu_custom_call.1} parent=1 // pred_check_branch
      %39 = sbr.rel (0) target = $region17
    $region16: #{tpu_custom_call.1} parent=1 // pred_region
      _
    $region17: #{tpu_custom_call.1} parent=1 // pred_fallthru
      _
    // Predicated region
    $region18: #{tpu_custom_call.1} parent=1 // pred_check
      _
    $region19: #{tpu_custom_call.1} parent=1 // pred_check_branch
      %41 = sbr.rel (0) target = $region21
    $region20: #{tpu_custom_call.1} parent=1 // pred_region
      %42 = dma.done [#allocation3], 128
    $region21: #{tpu_custom_call.1} parent=1 // pred_fallthru
      _
    // Predicated region
    $region22: #{tpu_custom_call.1} parent=1 // pred_check
      _
    $region23: #{tpu_custom_call.1} parent=1 // pred_check_branch
      %44 = sbr.rel (0) target = $region25
    $region24: #{tpu_custom_call.1} parent=1 // pred_region
      %45 = dma.done [#allocation6], 576
    $region25: #{tpu_custom_call.1} parent=1 // pred_fallthru
      _
    %v47 = vld [vmem:[#allocation2] sm:$0xf]
    %v48 = vld [vmem:[#allocation2 + $0x4] sm:$0xf]
    %v49 = vld [vmem:[#allocation5] sm:$0xf]
    %v50 = vld [vmem:[#allocation5 + $0x4] sm:$0xf]
    %v51 = vld [vmem:[#allocation5 + $0x8] sm:$0xf]
    %v52 = vld [vmem:[#allocation5 + $0xc] sm:$0xf]
    %v53 = vld [vmem:[#allocation5 + $0x10] sm:$0xf]
    %v54 = vld [vmem:[#allocation5 + $0x14] sm:$0xf]
    %v55 = vld [vmem:[#allocation5 + $0x18] sm:$0xf]
    %v56 = vld [vmem:[#allocation5 + $0x1c] sm:$0xf]
    %v57 = vld [vmem:[#allocation5 + $0x20] sm:$0xf]
    %v60 = vunpack.c.l.b16 %v47
    %v61 = vunpack.c.l.b16 %v48
    %v62 = vpack.c.b16 %v61, %v60
    %v72 = vunpack.c.l.b16 %v49
    %v73 = vunpack.c.l.b16 %v50
    %v74 = vunpack.c.l.b16 %v51
    %v75 = vunpack.c.l.b16 %v52
    %v76 = vunpack.c.l.b16 %v53
    %v77 = vunpack.c.l.b16 %v54
    %v78 = vunpack.c.l.b16 %v55
    %v79 = vunpack.c.l.b16 %v56
    %v80 = vunpack.c.l.b16 %v57
    %v81 = vpack.c.b16 %v73, %v72
    %v82 = vpack.c.b16 %v75, %v74
    %v83 = vpack.c.b16 %v77, %v76
    %v84 = vpack.c.b16 %v79, %v78
    %v85 = vpack.c.b16 %v80, %v80
    %vm90 = vcmask 588800
    %v92 = vsel %vm90, %v62, 0
    %vm94 = vcmask 1043456
    %v96 = vsel %vm94, %v85, 0
    %98 = vmatprep.subr.bf16.mxu0 0
    %99 = vmatpush1.bf16.msra.mxu0 0
    %100 = vmatprep.subr.bf16.mxu0 0
    %101 = vmatpush1.bf16.msra.mxu0 0
    %102 = vmatprep.subr.bf16.mxu0 0
    %103 = vmatpush1.bf16.msra.mxu0 0
    %104 = vmatprep.subr.bf16.mxu0 0
    %105 = vmatpush1.bf16.msra.mxu0 %v96
    %106 = vmatprep.subr.bf16.mxu0 0
    %107 = vmatpush1.bf16.msra.mxu0 %v84
    %108 = vmatprep.subr.bf16.mxu0 0
    %109 = vmatpush1.bf16.msra.mxu0 %v83
    %110 = vmatprep.subr.bf16.mxu0 0
    %111 = vmatpush1.bf16.msra.mxu0 %v82
    %112 = vmatprep.subr.bf16.mxu0 0
    %113 = vmatpush1.bf16.msra.mxu0 %v81
    %114 = vmatprep.subr.bf16.mxu0 0
    %115 = vmatpush2.bf16.msra.mxu0 0
    %116 = vmatprep.subr.bf16.mxu0 0
    %117 = vmatpush2.bf16.msra.mxu0 0
    %118 = vmatprep.subr.bf16.mxu0 0
    %119 = vmatpush2.bf16.msra.mxu0 0
    %120 = vmatprep.subr.bf16.mxu0 0
    %121 = vmatpush2.bf16.msra.mxu0 0
    %122 = vmatprep.subr.bf16.mxu0 0
    %123 = vmatpush2.bf16.msra.mxu0 0
    %124 = vmatprep.subr.bf16.mxu0 0
    %125 = vmatpush2.bf16.msra.mxu0 0
    %126 = vmatprep.subr.bf16.mxu0 0
    %127 = vmatpush2.bf16.msra.mxu0 0
    %128 = vmatprep.subr.bf16.mxu0 0
    %129 = vmatpush2.bf16.msra.mxu0 0
    %130 = vmatprep.mubr.bf16.mxu0 0
    %131 = vmatmul.mubr.bf16.gmra.mxu0 %v92
    %v132 = vpop.f32.mrf.mxu0
    %v133 = vadd.f32 0.0, %v132
    %v134 = vpop.f32.mrf.mxu0
    %v135 = vpop.f32.mrf.mxu0
    %v136 = vadd.f32 0.0, %v135
    %v137 = vpop.f32.mrf.mxu0
    %138 = vdwg.mxu0
    %v139 = vld [vmem:[%s2] sm:$0x1]
    %v140 = vld [vmem:[%s3] sm:$0x1]
    %v142 = vlaneseq
    %v143 = vshrl.u32 %v142, 7
    %v144 = vsub.s32 0, %v143
    %v145 = vrot.slane %v139, %v144
    %v147 = vmul.f32 %v133, %v145
    %v148 = vmul.f32 %v136, %v145
    %v150 = vlaneseq
    %v151 = vshrl.u32 %v150, 7
    %v152 = vsub.s32 0, %v151
    %v153 = vrot.slane %v140, %v152
    %v155 = vadd.f32 %v147, %v153
    %v156 = vadd.f32 %v148, %v153
    %v157 = vpack.c.bf16 %v156, %v155
    %v159 = vunpack.c.l.b16 %v157
    %v160 = vunpack.c.h.b16 %v157
    %v161 = vpack.c.b16 %v159, %v159
    %v162 = vpack.c.b16 %v160, %v160
    %165 = vst [vmem:[#allocation7] sm:$0xf] %v161
    %166 = vst [vmem:[#allocation7 + $0x4] sm:$0xf] %v162
    // Predicated region
    $region26: #{tpu_custom_call.1} parent=1 // pred_check
      _
    $region27: #{tpu_custom_call.1} parent=1 // pred_check_branch
      %168 = sbr.rel (0) target = $region29
    $region28: #{tpu_custom_call.1} parent=1 // pred_region
      %s170 = ssub.s32 128, 128
      %171 = vsyncadd [#allocation4], %s170
      %s172 = sshll.u32 [#allocation7], 4
      %s173 = int_to_ptr.vmem [resolvable:$true] %s172
      %178 = dma.vmem_to_hbm [thread:$0]  %s173, 128, %s4, [#allocation4], 64, 64, 4
    $region29: #{tpu_custom_call.1} parent=1 // pred_fallthru
      _
    // Predicated region
    $region30: #{tpu_custom_call.1} parent=1 // pred_check
      _
    $region31: #{tpu_custom_call.1} parent=1 // pred_check_branch
      %180 = sbr.rel (0) target = $region33
    $region32: #{tpu_custom_call.1} parent=1 // pred_region
      %181 = dma.done [#allocation4], 128
    $region33: #{tpu_custom_call.1} parent=1 // pred_fallthru
      _
    %182 = vsyncpa [#allocation3], 1
    %183 = vsyncpa [#allocation6], 1
    %184 = vsyncpa [#allocation4], 1

</llo_original>
